<compile_context>
chip_gen: v7x
topology: tpu7x:2x2x1
jax: 0.10.0
libtpu: 0.0.40
codegen_flags: <defaults>
</compile_context>

<pallas_src>
import numpy as np
import jax
import jax.numpy as jnp
from jax.experimental import pallas as pl
from jax.experimental.pallas import tpu as pltpu

K = 4            # number of agents (num_agent == 4 only)
V = 4            # views per ego agent: ego-only + one per other agent's message
P = V - 1        # match-cost rows per ego agent
N = K * P        # total number of (src -> tgt) com pairs under detection = 12
F_DIM = 32       # surrogate per-view feature width
D_DIM = 128      # surrogate box-descriptor width (lane axis)
THRESHOLD = 2.0  # self.threshold = 2 in the PyTorch module
_MAD_EPS = 1e-12  # guard: MAD == 0 would otherwise give inf/NaN robust scores


def detector_kernel(feats_ref, w_ref, out_ref):
    # feats_ref: (K*V*K, F) bf16   row index = i*(V*K) + v*K + a
    # w_ref:     (F, D) bf16
    # out_ref:   (2K, 128) f32 lane-dense slab:
    #              rows 0:K , lanes 0:P*K -> match costs  (K, P*K)
    #              rows K:2K, lanes 0:P*K -> robust scores (K, P*K)
    boxes = jnp.dot(feats_ref[...], w_ref[...],
                    preferred_element_type=jnp.float32)           # (K*V*K, D) on the MXU

    # Batched matcher cost: mc3[i, v-1, a] = mean_d |box[i,v,a,d] - box[i,0,a,d]|
    boxes4 = boxes.reshape(K, V, K, D_DIM)
    mc3 = jnp.mean(jnp.abs(boxes4[:, 1:, :, :] - boxes4[:, 0:1, :, :]),
                   axis=-1)                                       # (K, P, K)
    mc_row = mc3.reshape(K, P * K)                                # (K, 12)

    # Batched exact median over each ego's 12 costs via rank counting (no sort):
    # the r-th order statistic is min{ x_j : #{x_m <= x_j} >= r+1 }.
    def _row_median(vals):                                        # vals: (K, n), n even
        n = vals.shape[-1]
        le = (vals[:, None, :] <= vals[:, :, None]).astype(jnp.float32)   # (K, n, n)
        cnt = jnp.sum(le, axis=-1)                                        # (K, n)
        lo = jnp.min(jnp.where(cnt >= float(n // 2), vals, jnp.inf),
                     axis=-1, keepdims=True)
        hi = jnp.min(jnp.where(cnt >= float(n // 2 + 1), vals, jnp.inf),
                     axis=-1, keepdims=True)
        return 0.5 * (lo + hi)                                            # (K, 1)

    med = _row_median(mc_row)                                     # (K, 1) per-ego median
    dev = jnp.abs(mc_row - med)                                   # (K, 12) |mc - med|
    mad = _row_median(dev)                                        # (K, 1) per-ego MAD

    inv = pl.reciprocal(jnp.maximum(mad * 1.4826, _MAD_EPS),
                        approx=True)                              # EUP, free co-issue
    score_row = dev * inv                                         # (K, 12) robust z-score
    # (the module only uses the diagonal entries score_row[i, p*K + i];
    #  the wrapper extracts them — computing all 12 is free when vectorised)

    # Lane-dense packing: scatter the 12 lanes into 128 with a tiny placement
    # matmul so both stores are full 128-lane unmasked stores.
    place = (jax.lax.broadcasted_iota(jnp.int32, (P * K, D_DIM), 0)
             == jax.lax.broadcasted_iota(jnp.int32, (P * K, D_DIM), 1)
             ).astype(jnp.float32)                                # (12, 128) identity pad
    out_ref[0:K, :] = jnp.dot(mc_row, place,
                              preferred_element_type=jnp.float32)
    out_ref[K:2 * K, :] = jnp.dot(score_row, place,
                                  preferred_element_type=jnp.float32)


def _run_detector_kernel(feats_bf16, w_bf16):
    # Gridless: the whole working set (feats 4 KB, w 8 KB, boxes 32 KB) fits
    # trivially in VMEM on v5e/v6e/v7x — a grid would only add per-step overhead.
    return pl.pallas_call(
        detector_kernel,
        out_shape=jax.ShapeDtypeStruct((2 * K, D_DIM), jnp.float32),
        in_specs=[
            pl.BlockSpec(memory_space=pltpu.MemorySpace.VMEM),
            pl.BlockSpec(memory_space=pltpu.MemorySpace.VMEM),
        ],
        out_specs=pl.BlockSpec(memory_space=pltpu.MemorySpace.VMEM),
    )(feats_bf16, w_bf16)


# ----------------------------- glue (plain JAX / numpy) -----------------------------

def _attack_det_com_pairs():
    """Surrogate for model.get_attack_det_com_pairs + the [1::2] cat:
    all directed pairs (src j -> tgt i), grouped by tgt agent i, pair = [batch, agent]."""
    srcs, tgts = [], []
    for i in range(K):
        for j in range(K):
            if j != i:
                srcs.append([0, j])
                tgts.append([0, i])
    return np.asarray(srcs, np.int32), np.asarray(tgts, np.int32)


def _label_attacker_np(srcs, tgts, attack_src, attack_tgt):
    a_src = np.asarray(attack_src)
    a_tgt = np.asarray(attack_tgt)
    if a_src.size == 0:
        return np.zeros(srcs.shape[0], np.int32)
    m_src = (srcs[:, None, :] == a_src[None, :, :]).all(-1)
    m_tgt = (tgts[:, None, :] == a_tgt[None, :, :]).all(-1)
    return (m_src & m_tgt).any(-1).astype(np.int32)               # (N,)


def _default_com_pair():
    """Surrogate for model.get_default_com_pair: all K*K directed pairs incl. self."""
    src = np.asarray([[0, j] for i in range(K) for j in range(K)], np.int32)
    tgt = np.asarray([[0, i] for i in range(K) for j in range(K)], np.int32)
    return src, tgt


def _rm_com_pair(com_src, com_tgt, det_src, det_tgt):
    keep = np.ones(len(com_src), bool)
    for s, t in zip(det_src, det_tgt):
        keep &= ~((com_src == s).all(1) & (com_tgt == t).all(1))
    return com_src[keep], com_tgt[keep]


def _surrogate_feats(bev, attack, attacker_label):
    """Deterministic stand-in for model.single_view_multi_com_forward + post_process.

    Builds (K, V, K, F) feature rows from pooled BEV stats; attacked views get a
    perturbation proportional to the attack magnitude so pairs actually differ.
    """
    # TODO(synk): real per-agent attack selection (attack[attack_tgt[:,1]==i]) needs the
    # external model forward; the surrogate only injects attacked-pair perturbations.
    a_agents, c = bev.shape[0], bev.shape[1]
    pooled = jnp.mean(bev, axis=(2, 3))                               # (A, C)
    base = jnp.tile(pooled, (1, F_DIM // c))                          # (A, F)
    atk_mag = jnp.mean(jnp.abs(attack)) if attack.size > 0 else jnp.float32(0.0)

    label_kp = jnp.asarray(attacker_label, jnp.float32).reshape(K, P)  # (K, P)
    pert = jnp.zeros((K, V), jnp.float32).at[:, 1:].set(label_kp * (3.0 + atk_mag))
    view_term = 0.1 * jnp.arange(V, dtype=jnp.float32)                # (V,)
    agent_term = 1.0 + 0.05 * jnp.arange(a_agents, dtype=jnp.float32)  # (A,)
    cross = view_term[None, :, None, None] * agent_term[None, None, :, None]
    ego_term = 0.01 * jnp.arange(K, dtype=jnp.float32)[:, None, None, None] \
        * view_term[None, :, None, None]

    feats = base[None, None, :, :] + pert[:, :, None, None] + cross + ego_term
    return feats.reshape(K * V * a_agents, F_DIM).astype(jnp.float32)


def match_cost_unsupervised_forward(bev, trans_matrices, num_agent, anchors,
                                    attack, attack_src, attack_tgt, w, batch_size=1):
    """Mirror of MatchCostUnsupervisedDetector.forward (load_score=False branch)."""
    del trans_matrices, anchors, batch_size   # consumed only by the external model
    k = int(num_agent[0, 0])
    assert k == K, "Only support num_agent=4"

    srcs_np, tgts_np = _attack_det_com_pairs()
    attacker_label = _label_attacker_np(srcs_np, tgts_np, attack_src, attack_tgt)  # (N,)

    feats_flat = _surrogate_feats(bev, attack, attacker_label)        # (K*V*K, F) f32
    feats_bf16 = feats_flat.astype(jnp.bfloat16)                      # MXU operands bf16
    w_bf16 = jnp.asarray(w).astype(jnp.bfloat16)

    slab = jax.block_until_ready(_run_detector_kernel(feats_bf16, w_bf16))
    slab_host = np.asarray(slab)                                      # single D2H sync

    mc = slab_host[:K, :P * K].reshape(K, P, K)                       # match_cost_list
    score_rows = slab_host[K:, :P * K]                                # (K, 12) z-scores
    diag_idx = np.arange(P)[None, :] * K + np.arange(K)[:, None]      # (K, P): p*K + i
    all_score = np.take_along_axis(score_rows, diag_idx, axis=1).reshape(-1)   # (12,)

    is_attacker = all_score > THRESHOLD
    total = int(attacker_label.shape[0])
    correct_cnt = int((is_attacker.astype(np.int32) == attacker_label).sum())

    detected_src = srcs_np[is_attacker]
    detected_tgt = tgts_np[is_attacker]
    com_src, com_tgt = _default_com_pair()
    com_src, com_tgt = _rm_com_pair(com_src, com_tgt, detected_src, detected_tgt)

    info = {'score': all_score,
            'label': attacker_label,
            'pred': is_attacker.astype(np.int64),
            'match_costs': [mc[i] for i in range(K)]}
    return com_src, com_tgt, total, correct_cnt, info, (feats_bf16, w_bf16)


def _numpy_reference(feats_f32, w_f32, label_flat):
    """float64 reference of the kernel math, fed the same bf16-rounded operands."""
    boxes = np.asarray(feats_f32, np.float64) @ np.asarray(w_f32, np.float64)
    scores, mcs = [], []
    for i in range(K):
        base = i * V * K
        ego = boxes[base: base + K]
        mc = np.stack([np.mean(np.abs(boxes[base + v * K: base + (v + 1) * K] - ego),
                               axis=-1) for v in range(1, V)])        # (P, K)
        flat = mc.reshape(-1)
        med = np.median(flat)
        mad = np.median(np.abs(flat - med))
        scores.append(np.abs(mc[:, i] - med) / max(mad * 1.4826, _MAD_EPS))
        mcs.append(mc)
    all_score = np.concatenate(scores)
    pred = (all_score > THRESHOLD).astype(np.int32)
    correct = int((pred == np.asarray(label_flat).reshape(-1)).sum())
    return all_score, np.stack(mcs), correct


if __name__ == "__main__":
    key = jax.random.PRNGKey(0)
    k1, k2, k3, k4 = jax.random.split(key, 4)

    A, C, H, W_ = K, 4, 16, 16
    bev = jax.random.normal(k1, (A, C, H, W_), jnp.float32)            # NCHW, batch=1 * 4 agents
    trans_matrices = jnp.tile(jnp.eye(4, dtype=jnp.float32), (1, A, A, 1, 1))
    num_agent = jnp.full((1, A), A, jnp.int32)
    anchors = jax.random.normal(k2, (H, W_, 6, 6), jnp.float32)
    attack = jax.random.normal(k3, (2, 2 * C, H // 2, W_ // 2), jnp.float32)
    attack_src = jnp.array([[0, 1], [0, 2]], jnp.int32)                # attacker agents 1 and 2
    attack_tgt = jnp.array([[0, 0], [0, 3]], jnp.int32)                # targeting agents 0 and 3

    # Deterministic surrogate "model head" weight (the only parameter).
    w = 0.1 * jax.random.normal(k4, (F_DIM, D_DIM), jnp.float32)

    com_src, com_tgt, total, correct, info, (feats_bf16, w_bf16) = \
        match_cost_unsupervised_forward(bev, trans_matrices, num_agent, anchors,
                                        attack, attack_src, attack_tgt, w)
    jax.block_until_ready(feats_bf16)

    # Validate the kernel against a float64 numpy reference of the same math,
    # using the same bf16-rounded operands the kernel consumed.
    feats_rt = np.asarray(feats_bf16.astype(jnp.float32))
    w_rt = np.asarray(w_bf16.astype(jnp.float32))
    ref_score, ref_mc, ref_correct = _numpy_reference(feats_rt, w_rt, info['label'])
    np.testing.assert_allclose(np.stack(info['match_costs']), ref_mc,
                               rtol=1e-3, atol=1e-5)
    np.testing.assert_allclose(info['score'], ref_score, rtol=5e-2, atol=5e-2)
    assert total == N
    assert correct == ref_correct

    print("KERNEL_OK")
</pallas_src>

<mosaic_0001>
module attributes {stable_mosaic.version = 11 : i64} {
  func.func @detector_kernel(%arg0: memref<64x32xbf16, #tpu.memory_space<vmem>>, %arg1: memref<32x128xbf16, #tpu.memory_space<vmem>>, %arg2: memref<8x128xf32, #tpu.memory_space<vmem>>) attributes {dimension_semantics = [], scalar_prefetch = 0 : i64, scratch_operands = 0 : i64, tpu.core_type = #tpu.core_type<tc>} {
    %c0 = arith.constant 0 : index
    %c0_0 = arith.constant 0 : index
    %0 = vector.load %arg0[%c0, %c0_0] : memref<64x32xbf16, #tpu.memory_space<vmem>>, vector<64x32xbf16>
    %c0_1 = arith.constant 0 : index
    %c0_2 = arith.constant 0 : index
    %1 = vector.load %arg1[%c0_1, %c0_2] : memref<32x128xbf16, #tpu.memory_space<vmem>>, vector<32x128xbf16>
    %cst = arith.constant dense<0.000000e+00> : vector<64x128xf32>
    %2 = tpu.matmul %0, %1, %cst {dimension_numbers = #tpu.dot_dimension_numbers<[1], [0], [0], [1], [0, 0, 1, 1], [], []>} : vector<64x32xbf16>, vector<32x128xbf16>, vector<64x128xf32> -> vector<64x128xf32>
    %3 = vector.shape_cast %2 : vector<64x128xf32> to vector<4x4x4x128xf32>
    %4 = vector.extract_strided_slice %3 {offsets = [0, 1, 0, 0], sizes = [4, 3, 4, 128], strides = [1, 1, 1, 1]} : vector<4x4x4x128xf32> to vector<4x3x4x128xf32>
    %5 = vector.extract_strided_slice %3 {offsets = [0, 0, 0, 0], sizes = [4, 1, 4, 128], strides = [1, 1, 1, 1]} : vector<4x4x4x128xf32> to vector<4x1x4x128xf32>
    %6 = vector.broadcast %5 : vector<4x1x4x128xf32> to vector<4x3x4x128xf32>
    %7 = arith.subf %4, %6 : vector<4x3x4x128xf32>
    %8 = math.absf %7 : vector<4x3x4x128xf32>
    %cst_3 = arith.constant dense<0.000000e+00> : vector<4x3x4xf32>
    %9 = vector.multi_reduction <add>, %8, %cst_3 [3] : vector<4x3x4x128xf32> to vector<4x3x4xf32>
    %cst_4 = arith.constant 1.280000e+02 : f32
    %10 = vector.broadcast %cst_4 : f32 to vector<4x3x4xf32>
    %11 = arith.divf %9, %10 : vector<4x3x4xf32>
    %12 = vector.shape_cast %11 : vector<4x3x4xf32> to vector<4x12xf32>
    %13 = vector.shape_cast %12 : vector<4x12xf32> to vector<4x1x12xf32>
    %14 = vector.shape_cast %12 : vector<4x12xf32> to vector<4x12x1xf32>
    %15 = vector.broadcast %13 : vector<4x1x12xf32> to vector<4x12x12xf32>
    %16 = vector.broadcast %14 : vector<4x12x1xf32> to vector<4x12x12xf32>
    %17 = arith.cmpf ole, %15, %16 : vector<4x12x12xf32>
    %18 = arith.extui %17 : vector<4x12x12xi1> to vector<4x12x12xi32>
    %19 = arith.sitofp %18 : vector<4x12x12xi32> to vector<4x12x12xf32>
    %cst_5 = arith.constant dense<0.000000e+00> : vector<4x12xf32>
    %20 = vector.multi_reduction <add>, %19, %cst_5 [2] : vector<4x12x12xf32> to vector<4x12xf32>
    %cst_6 = arith.constant 6.000000e+00 : f32
    %21 = vector.broadcast %cst_6 : f32 to vector<4x12xf32>
    %22 = arith.cmpf oge, %20, %21 : vector<4x12xf32>
    %cst_7 = arith.constant 0x7F800000 : f32
    %23 = vector.broadcast %cst_7 : f32 to vector<4x12xf32>
    %24 = arith.select %22, %12, %23 : vector<4x12xi1>, vector<4x12xf32>
    %cst_8 = arith.constant dense<0x7F800000> : vector<4xf32>
    %25 = vector.multi_reduction <minimumf>, %24, %cst_8 [1] : vector<4x12xf32> to vector<4xf32>
    %26 = vector.shape_cast %25 : vector<4xf32> to vector<4x1xf32>
    %cst_9 = arith.constant 7.000000e+00 : f32
    %27 = vector.broadcast %cst_9 : f32 to vector<4x12xf32>
    %28 = arith.cmpf oge, %20, %27 : vector<4x12xf32>
    %cst_10 = arith.constant 0x7F800000 : f32
    %29 = vector.broadcast %cst_10 : f32 to vector<4x12xf32>
    %30 = arith.select %28, %12, %29 : vector<4x12xi1>, vector<4x12xf32>
    %cst_11 = arith.constant dense<0x7F800000> : vector<4xf32>
    %31 = vector.multi_reduction <minimumf>, %30, %cst_11 [1] : vector<4x12xf32> to vector<4xf32>
    %32 = vector.shape_cast %31 : vector<4xf32> to vector<4x1xf32>
    %33 = arith.addf %26, %32 : vector<4x1xf32>
    %cst_12 = arith.constant 5.000000e-01 : f32
    %34 = vector.broadcast %cst_12 : f32 to vector<4x1xf32>
    %35 = arith.mulf %34, %33 : vector<4x1xf32>
    %36 = vector.broadcast %35 : vector<4x1xf32> to vector<4x12xf32>
    %37 = arith.subf %12, %36 : vector<4x12xf32>
    %38 = math.absf %37 : vector<4x12xf32>
    %39 = vector.shape_cast %38 : vector<4x12xf32> to vector<4x1x12xf32>
    %40 = vector.shape_cast %38 : vector<4x12xf32> to vector<4x12x1xf32>
    %41 = vector.broadcast %39 : vector<4x1x12xf32> to vector<4x12x12xf32>
    %42 = vector.broadcast %40 : vector<4x12x1xf32> to vector<4x12x12xf32>
    %43 = arith.cmpf ole, %41, %42 : vector<4x12x12xf32>
    %44 = arith.extui %43 : vector<4x12x12xi1> to vector<4x12x12xi32>
    %45 = arith.sitofp %44 : vector<4x12x12xi32> to vector<4x12x12xf32>
    %cst_13 = arith.constant dense<0.000000e+00> : vector<4x12xf32>
    %46 = vector.multi_reduction <add>, %45, %cst_13 [2] : vector<4x12x12xf32> to vector<4x12xf32>
    %cst_14 = arith.constant 6.000000e+00 : f32
    %47 = vector.broadcast %cst_14 : f32 to vector<4x12xf32>
    %48 = arith.cmpf oge, %46, %47 : vector<4x12xf32>
    %cst_15 = arith.constant 0x7F800000 : f32
    %49 = vector.broadcast %cst_15 : f32 to vector<4x12xf32>
    %50 = arith.select %48, %38, %49 : vector<4x12xi1>, vector<4x12xf32>
    %cst_16 = arith.constant dense<0x7F800000> : vector<4xf32>
    %51 = vector.multi_reduction <minimumf>, %50, %cst_16 [1] : vector<4x12xf32> to vector<4xf32>
    %52 = vector.shape_cast %51 : vector<4xf32> to vector<4x1xf32>
    %cst_17 = arith.constant 7.000000e+00 : f32
    %53 = vector.broadcast %cst_17 : f32 to vector<4x12xf32>
    %54 = arith.cmpf oge, %46, %53 : vector<4x12xf32>
    %cst_18 = arith.constant 0x7F800000 : f32
    %55 = vector.broadcast %cst_18 : f32 to vector<4x12xf32>
    %56 = arith.select %54, %38, %55 : vector<4x12xi1>, vector<4x12xf32>
    %cst_19 = arith.constant dense<0x7F800000> : vector<4xf32>
    %57 = vector.multi_reduction <minimumf>, %56, %cst_19 [1] : vector<4x12xf32> to vector<4xf32>
    %58 = vector.shape_cast %57 : vector<4xf32> to vector<4x1xf32>
    %59 = arith.addf %52, %58 : vector<4x1xf32>
    %cst_20 = arith.constant 5.000000e-01 : f32
    %60 = vector.broadcast %cst_20 : f32 to vector<4x1xf32>
    %61 = arith.mulf %60, %59 : vector<4x1xf32>
    %cst_21 = arith.constant 1.482600e+00 : f32
    %62 = vector.broadcast %cst_21 : f32 to vector<4x1xf32>
    %63 = arith.mulf %61, %62 : vector<4x1xf32>
    %cst_22 = arith.constant 9.99999996E-13 : f32
    %64 = vector.broadcast %cst_22 : f32 to vector<4x1xf32>
    %65 = arith.maximumf %63, %64 : vector<4x1xf32>
    %66 = tpu.reciprocal %65 {approx = true} : vector<4x1xf32> -> vector<4x1xf32>
    %67 = vector.broadcast %66 : vector<4x1xf32> to vector<4x12xf32>
    %68 = arith.mulf %38, %67 : vector<4x12xf32>
    %69 = tpu.iota {dimensions = array<i32: 0>} : vector<12x128xi32>
    %70 = tpu.iota {dimensions = array<i32: 1>} : vector<12x128xi32>
    %71 = arith.cmpi eq, %69, %70 : vector<12x128xi32>
    %72 = arith.extui %71 : vector<12x128xi1> to vector<12x128xi32>
    %73 = arith.sitofp %72 : vector<12x128xi32> to vector<12x128xf32>
    %cst_23 = arith.constant dense<0.000000e+00> : vector<4x128xf32>
    %74 = tpu.matmul %12, %73, %cst_23 {dimension_numbers = #tpu.dot_dimension_numbers<[1], [0], [0], [1], [0, 0, 1, 1], [], []>} : vector<4x12xf32>, vector<12x128xf32>, vector<4x128xf32> -> vector<4x128xf32>
    %c0_24 = arith.constant 0 : index
    %c0_25 = arith.constant 0 : index
    %75 = vector.load %arg2[%c0_24, %c0_25] : memref<8x128xf32, #tpu.memory_space<vmem>>, vector<4x128xf32>
    tpu.vector_store %arg2[%c0_24, %c0_25], %74 {strides = array<i32>} : memref<8x128xf32, #tpu.memory_space<vmem>>, vector<4x128xf32>,
    %cst_26 = arith.constant dense<0.000000e+00> : vector<4x128xf32>
    %76 = tpu.matmul %68, %73, %cst_26 {dimension_numbers = #tpu.dot_dimension_numbers<[1], [0], [0], [1], [0, 0, 1, 1], [], []>} : vector<4x12xf32>, vector<12x128xf32>, vector<4x128xf32> -> vector<4x128xf32>
    %c4 = arith.constant 4 : index
    %c0_27 = arith.constant 0 : index
    %77 = vector.load %arg2[%c4, %c0_27] : memref<8x128xf32, #tpu.memory_space<vmem>>, vector<4x128xf32>
    tpu.vector_store %arg2[%c4, %c0_27], %76 {strides = array<i32>} : memref<8x128xf32, #tpu.memory_space<vmem>>, vector<4x128xf32>,
    return
  }
}

</mosaic_0001>

<llo_original>
// kernel: tpu_custom_call.1
$region0: #{tpu_custom_call.1}
  #allocation0 [shape = 'u32[]', space=smem, size = 0x4, offset = 0x4, fixed_abs, tag = 'smem constant byte address 0x4 - core index']
  #allocation1 [shape = 'u32[144,128]{1,0:T(1,128)}', space=vmem, size = 0x12000, scoped, tag = 'internal scratch']
  %s0 = inlined_call_operand.vmem [shape: bf16[64,32], index: 0, kind: input, shape index: {}]
  %s1 = inlined_call_operand.vmem [shape: bf16[32,128], index: 1, kind: input, shape index: {}]
  %s2 = inlined_call_operand.hbm [shape: f32[8,128], index: 2, kind: output, shape index: {}]
  %s3 = sld [smem:[#allocation0]]
  $region18: #{tpu_custom_call.1} parent=0
    _
  %s5 = ssub.s32 1, %s3
  %s6 = scalar_select 0, %s5, %s3
  $region1: #{tpu_custom_call.1} parent=0
    #allocation2 [shape = 'u8[4096]{0}', space=vmem, size = 0x1000, scoped, tag = 'output window, operand 0, single buffered']
    #allocation3 [shape = 's32[1]{0}', space=sflag, size = 0x4, scoped, tag = 'scoped memory for tpu_custom_call.1']
    %7 = vsyncpa [#allocation3], 0
    // Predicated region
    $region2: #{tpu_custom_call.1} parent=1 // pred_check
      _
    $region3: #{tpu_custom_call.1} parent=1 // pred_check_branch
      %9 = sbr.rel (0) target = $region5
    $region4: #{tpu_custom_call.1} parent=1 // pred_region
      _
    $region5: #{tpu_custom_call.1} parent=1 // pred_fallthru
      _
    // Predicated region
    $region6: #{tpu_custom_call.1} parent=1 // pred_check
      _
    $region7: #{tpu_custom_call.1} parent=1 // pred_check_branch
      %11 = sbr.rel (0) target = $region9
    $region8: #{tpu_custom_call.1} parent=1 // pred_region
      _
    $region9: #{tpu_custom_call.1} parent=1 // pred_fallthru
      _
    %v13 = vld [vmem:[%s0] sm:$0xf]
    %v14 = vld [vmem:[%s0 + $0x4] sm:$0xf]
    %v15 = vld [vmem:[%s0 + $0x8] sm:$0xf]
    %v16 = vld [vmem:[%s0 + $0xc] sm:$0xf]
    %v17 = vld [vmem:[%s0 + $0x10] sm:$0xf]
    %v18 = vld [vmem:[%s0 + $0x14] sm:$0xf]
    %v19 = vld [vmem:[%s0 + $0x18] sm:$0xf]
    %v20 = vld [vmem:[%s0 + $0x1c] sm:$0xf]
    %v21 = vld [vmem:[%s1] sm:$0xf]
    %v22 = vld [vmem:[%s1 + $0x4] sm:$0xf]
    %v23 = vld [vmem:[%s1 + $0x8] sm:$0xf]
    %v24 = vld [vmem:[%s1 + $0xc] sm:$0xf]
    %v33 = vunpack.c.l.b16 %v13
    %v34 = vunpack.c.l.b16 %v14
    %v35 = vunpack.c.l.b16 %v15
    %v36 = vunpack.c.l.b16 %v16
    %v37 = vunpack.c.l.b16 %v17
    %v38 = vunpack.c.l.b16 %v18
    %v39 = vunpack.c.l.b16 %v19
    %v40 = vunpack.c.l.b16 %v20
    %v41 = vpack.c.b16 %v34, %v33
    %v42 = vpack.c.b16 %v36, %v35
    %v43 = vpack.c.b16 %v38, %v37
    %v44 = vpack.c.b16 %v40, %v39
    %v49 = vunpack.c.l.b16 %v21
    %v50 = vunpack.c.l.b16 %v22
    %v51 = vunpack.c.l.b16 %v23
    %v52 = vunpack.c.l.b16 %v24
    %v53 = vpack.c.b16 %v50, %v49
    %v54 = vpack.c.b16 %v52, %v51
    %vm57 = vcmask 261120
    %v59 = vsel %vm57, %v41, 0
    %v62 = vsel %vm57, %v42, 0
    %v65 = vsel %vm57, %v43, 0
    %v68 = vsel %vm57, %v44, 0
    %70 = vmatprep.subr.bf16.mxu0 0
    %71 = vmatpush1.bf16.msra.mxu0 %v53
    %72 = vmatprep.subr.bf16.mxu0 0
    %73 = vmatpush1.bf16.msra.mxu0 %v54
    %74 = vmatprep.subr.bf16.mxu0 0
    %75 = vmatpush1.bf16.msra.mxu0 0
    %76 = vmatprep.subr.bf16.mxu0 0
    %77 = vmatpush1.bf16.msra.mxu0 0
    %78 = vmatprep.subr.bf16.mxu0 0
    %79 = vmatpush1.bf16.msra.mxu0 0
    %80 = vmatprep.subr.bf16.mxu0 0
    %81 = vmatpush1.bf16.msra.mxu0 0
    %82 = vmatprep.subr.bf16.mxu0 0
    %83 = vmatpush1.bf16.msra.mxu0 0
    %84 = vmatprep.subr.bf16.mxu0 0
    %85 = vmatpush1.bf16.msra.mxu0 0
    %86 = vmatprep.subr.bf16.mxu0 0
    %87 = vmatpush1.bf16.msra.mxu0 0
    %88 = vmatprep.subr.bf16.mxu0 0
    %89 = vmatpush1.bf16.msra.mxu0 0
    %90 = vmatprep.subr.bf16.mxu0 0
    %91 = vmatpush1.bf16.msra.mxu0 0
    %92 = vmatprep.subr.bf16.mxu0 0
    %93 = vmatpush1.bf16.msra.mxu0 0
    %94 = vmatprep.subr.bf16.mxu0 0
    %95 = vmatpush1.bf16.msra.mxu0 0
    %96 = vmatprep.subr.bf16.mxu0 0
    %97 = vmatpush1.bf16.msra.mxu0 0
    %98 = vmatprep.subr.bf16.mxu0 0
    %99 = vmatpush1.bf16.msra.mxu0 0
    %100 = vmatprep.subr.bf16.mxu0 0
    %101 = vmatpush1.bf16.msra.mxu0 0
    %102 = vmatprep.mubr.bf16.mxu0 0
    %103 = vmatmul.mubr.bf16.gmra.mrb[0].mxu0 %v59
    %v104 = vpop.f32.mrb[0].mxu0
    %v105 = vadd.f32 0.0, %v104
    %v106 = vpop.f32.mrb[0].mxu0
    %v107 = vpop.f32.mrb[0].mxu0
    %v108 = vadd.f32 0.0, %v107
    %v109 = vpop.f32.mrb[0].mxu0
    %110 = vmatprep.mubr.bf16.mxu0 0
    %111 = vmatmul.mubr.bf16.gmra.mrb[0].mxu0 %v62
    %v112 = vpop.f32.mrb[0].mxu0
    %v113 = vadd.f32 0.0, %v112
    %v114 = vpop.f32.mrb[0].mxu0
    %v115 = vpop.f32.mrb[0].mxu0
    %v116 = vadd.f32 0.0, %v115
    %v117 = vpop.f32.mrb[0].mxu0
    %118 = vmatprep.mubr.bf16.mxu0 0
    %119 = vmatmul.mubr.bf16.gmra.mrb[0].mxu0 %v65
    %v120 = vpop.f32.mrb[0].mxu0
    %v121 = vadd.f32 0.0, %v120
    %v122 = vpop.f32.mrb[0].mxu0
    %v123 = vpop.f32.mrb[0].mxu0
    %v124 = vadd.f32 0.0, %v123
    %v125 = vpop.f32.mrb[0].mxu0
    %126 = vmatprep.mubr.bf16.mxu0 0
    %127 = vmatmul.mubr.bf16.gmra.mrb[0].mxu0 %v68
    %v128 = vpop.f32.mrb[0].mxu0
    %v129 = vadd.f32 0.0, %v128
    %v130 = vpop.f32.mrb[0].mxu0
    %v131 = vpop.f32.mrb[0].mxu0
    %v132 = vadd.f32 0.0, %v131
    %v133 = vpop.f32.mrb[0].mxu0
    %134 = vdwg.mxu0
    %v143 = vcombine.high %v105, %v105
    %v144 = vcombine.high %v108, %v108
    %v145 = vcombine.high %v113, %v113
    %v146 = vcombine.high %v116, %v116
    %v147 = vcombine.high %v121, %v121
    %v148 = vcombine.high %v124, %v124
    %v149 = vcombine.high %v129, %v129
    %v150 = vcombine.high %v132, %v132
    %v159 = vsub.f32 %v143, %v105
    %v160 = vsub.f32 %v108, %v105
    %v161 = vsub.f32 %v144, %v105
    %v162 = vsub.f32 %v145, %v113
    %v163 = vsub.f32 %v116, %v113
    %v164 = vsub.f32 %v146, %v113
    %v165 = vsub.f32 %v147, %v121
    %v166 = vsub.f32 %v124, %v121
    %v167 = vsub.f32 %v148, %v121
    %v168 = vsub.f32 %v149, %v129
    %v169 = vsub.f32 %v132, %v129
    %v170 = vsub.f32 %v150, %v129
    %v171 = vand.u32 2147483647, %v159
    %v172 = vand.u32 2147483647, %v160
    %v173 = vand.u32 2147483647, %v161
    %v174 = vand.u32 2147483647, %v162
    %v175 = vand.u32 2147483647, %v163
    %v176 = vand.u32 2147483647, %v164
    %v177 = vand.u32 2147483647, %v165
    %v178 = vand.u32 2147483647, %v166
    %v179 = vand.u32 2147483647, %v167
    %v180 = vand.u32 2147483647, %v168
    %v181 = vand.u32 2147483647, %v169
    %v182 = vand.u32 2147483647, %v170
    %vm183 = vcmask 1043456
    %v184 = vsel %vm183, %v171, 0.0
    %185 = vadd.xlane.f32.xlu0 %v184
    %v186 = vpop.xlane.xlu0 %185
    %v187 = vsel %vm183, %v172, 0.0
    %188 = vadd.xlane.f32.xlu0 %v187
    %v189 = vpop.xlane.xlu0 %188
    %v190 = vsel %vm183, %v173, 0.0
    %191 = vadd.xlane.f32.xlu0 %v190
    %v192 = vpop.xlane.xlu0 %191
    %v193 = vsel %vm183, %v174, 0.0
    %194 = vadd.xlane.f32.xlu0 %v193
    %v195 = vpop.xlane.xlu0 %194
    %v196 = vsel %vm183, %v175, 0.0
    %197 = vadd.xlane.f32.xlu0 %v196
    %v198 = vpop.xlane.xlu0 %197
    %v199 = vsel %vm183, %v176, 0.0
    %200 = vadd.xlane.f32.xlu0 %v199
    %v201 = vpop.xlane.xlu0 %200
    %v202 = vsel %vm183, %v177, 0.0
    %203 = vadd.xlane.f32.xlu0 %v202
    %v204 = vpop.xlane.xlu0 %203
    %v205 = vsel %vm183, %v178, 0.0
    %206 = vadd.xlane.f32.xlu0 %v205
    %v207 = vpop.xlane.xlu0 %206
    %v208 = vsel %vm183, %v179, 0.0
    %209 = vadd.xlane.f32.xlu0 %v208
    %v210 = vpop.xlane.xlu0 %209
    %v211 = vsel %vm183, %v180, 0.0
    %212 = vadd.xlane.f32.xlu0 %v211
    %v213 = vpop.xlane.xlu0 %212
    %v214 = vsel %vm183, %v181, 0.0
    %215 = vadd.xlane.f32.xlu0 %v214
    %v216 = vpop.xlane.xlu0 %215
    %v217 = vsel %vm183, %v182, 0.0
    %218 = vadd.xlane.f32.xlu0 %v217
    %v219 = vpop.xlane.xlu0 %218
    %v220 = vrcp.pop 128.0
    %v221 = vmul.f32 %v186, %v220
    %v222 = vmul.f32 %v189, %v220
    %v223 = vmul.f32 %v192, %v220
    %v224 = vmul.f32 %v195, %v220
    %v225 = vmul.f32 %v198, %v220
    %v226 = vmul.f32 %v201, %v220
    %v227 = vmul.f32 %v204, %v220
    %v228 = vmul.f32 %v207, %v220
    %v229 = vmul.f32 %v210, %v220
    %v230 = vmul.f32 %v213, %v220
    %v231 = vmul.f32 %v216, %v220
    %v232 = vmul.f32 %v219, %v220
    %v245 = vlaneseq
    %v246 = vand.u32 %v245, 127
    %v247 = vlaneseq
    %v248 = vshrl.u32 %v247, 7
    %v249 = vsub.s32 %v246, %v248
    %v250 = vrot.slane %v221, %v249
    %v251 = vlaneseq
    %v252 = vshrl.u32 %v251, 7
    %v253 = vsub.s32 %v246, %v252
    %v254 = vrot.slane %v222, %v253
    %v255 = vlaneseq
    %v256 = vshrl.u32 %v255, 7
    %v257 = vsub.s32 %v246, %v256
    %v258 = vrot.slane %v223, %v257
    %v259 = vlaneseq
    %v260 = vshrl.u32 %v259, 7
    %v261 = vsub.s32 %v246, %v260
    %v262 = vrot.slane %v224, %v261
    %v263 = vlaneseq
    %v264 = vshrl.u32 %v263, 7
    %v265 = vsub.s32 %v246, %v264
    %v266 = vrot.slane %v225, %v265
    %v267 = vlaneseq
    %v268 = vshrl.u32 %v267, 7
    %v269 = vsub.s32 %v246, %v268
    %v270 = vrot.slane %v226, %v269
    %v271 = vlaneseq
    %v272 = vshrl.u32 %v271, 7
    %v273 = vsub.s32 %v246, %v272
    %v274 = vrot.slane %v227, %v273
    %v275 = vlaneseq
    %v276 = vshrl.u32 %v275, 7
    %v277 = vsub.s32 %v246, %v276
    %v278 = vrot.slane %v228, %v277
    %v279 = vlaneseq
    %v280 = vshrl.u32 %v279, 7
    %v281 = vsub.s32 %v246, %v280
    %v282 = vrot.slane %v229, %v281
    %v283 = vlaneseq
    %v284 = vshrl.u32 %v283, 7
    %v285 = vsub.s32 %v246, %v284
    %v286 = vrot.slane %v230, %v285
    %v287 = vlaneseq
    %v288 = vshrl.u32 %v287, 7
    %v289 = vsub.s32 %v246, %v288
    %v290 = vrot.slane %v231, %v289
    %v291 = vlaneseq
    %v292 = vshrl.u32 %v291, 7
    %v293 = vsub.s32 %v246, %v292
    %v294 = vrot.slane %v232, %v293
    %vm295 = vcmask 1041409
    %v296 = vsel %vm295, %v254, %v250
    %vm297 = vcmask 1042434
    %v298 = vsel %vm297, %v258, %v296
    %v299 = vsel %vm295, %v266, %v262
    %v300 = vsel %vm297, %v270, %v299
    %v301 = vsel %vm295, %v278, %v274
    %v302 = vsel %vm297, %v282, %v301
    %v303 = vsel %vm295, %v290, %v286
    %v304 = vsel %vm297, %v294, %v303
    %v309 = vcombine.low %v298, %v302
    %v311 = vunpack.c.l.s4 1983009808
    %v312 = vunpack.c.0.s8 %v311
    %v313 = vlaneseq
    %v314 = vshrl.u32 %v313, 7
    %v315 = vsub.s32 %v312, %v314
    %v316 = vrot.slane %v309, %v315
    %v317 = vcombine.low %v300, %v304
    %v319 = vunpack.c.l.s4 1983009808
    %v320 = vunpack.c.0.s8 %v319
    %v321 = vlaneseq
    %v322 = vshrl.u32 %v321, 7
    %v323 = vsub.s32 %v320, %v322
    %v324 = vrot.slane %v317, %v323
    %v325 = vcombine.low %v316, %v324
    %v326 = vcombine.high %v316, %v324
    %v328 = vunpack.c.l.s4 1934713408
    %v329 = vunpack.c.0.s8 %v328
    %v330 = vlaneseq
    %v331 = vshrl.u32 %v330, 7
    %v332 = vsub.s32 %v329, %v331
    %v333 = vrot.slane %v325, %v332
    %v334 = vcombine.high %v333, 0.0
    %v336 = vunpack.c.l.s4 1934713408
    %v337 = vunpack.c.0.s8 %v336
    %v338 = vlaneseq
    %v339 = vshrl.u32 %v338, 7
    %v340 = vsub.s32 %v337, %v339
    %v341 = vrot.slane %v326, %v340
    %343 = vrot.lane.b32.xlu0 %v334, 4
    %v344 = vpop.permute.xlu0 %343
    %347 = vrot.lane.b32.xlu0 %v341, 8
    %v348 = vpop.permute.xlu0 %347
    %vm350 = vcmask 31744
    %v351 = vsel %vm350, %v333, %v344
    %vm352 = vcmask 64512
    %v353 = vsel %vm352, %v351, %v348
    %v355 = vunpack.c.l.s4 1983009808
    %v356 = vunpack.c.0.s8 %v355
    %v357 = vlaneseq
    %v358 = vshrl.u32 %v357, 7
    %v359 = vsub.s32 %v356, %v358
    %v360 = vrot.slane %v298, %v359
    %v362 = vunpack.c.l.s4 1934713408
    %v363 = vunpack.c.0.s8 %v362
    %v364 = vlaneseq
    %v365 = vshrl.u32 %v364, 7
    %v366 = vsub.s32 %v363, %v365
    %v367 = vrot.slane %v360, %v366
    %v368 = vcombine.high %v367, 0.0
    %v369 = vcombine.high %v360, 0.0
    %v371 = vunpack.c.l.s4 1983009808
    %v372 = vunpack.c.0.s8 %v371
    %v373 = vlaneseq
    %v374 = vshrl.u32 %v373, 7
    %v375 = vsub.s32 %v372, %v374
    %v376 = vrot.slane %v300, %v375
    %v378 = vunpack.c.l.s4 1934713408
    %v379 = vunpack.c.0.s8 %v378
    %v380 = vlaneseq
    %v381 = vshrl.u32 %v380, 7
    %v382 = vsub.s32 %v379, %v381
    %v383 = vrot.slane %v376, %v382
    %v384 = vcombine.high %v383, 0.0
    %v385 = vcombine.high %v376, 0.0
    %v387 = vunpack.c.l.s4 1983009808
    %v388 = vunpack.c.0.s8 %v387
    %v389 = vlaneseq
    %v390 = vshrl.u32 %v389, 7
    %v391 = vsub.s32 %v388, %v390
    %v392 = vrot.slane %v302, %v391
    %v394 = vunpack.c.l.s4 1934713408
    %v395 = vunpack.c.0.s8 %v394
    %v396 = vlaneseq
    %v397 = vshrl.u32 %v396, 7
    %v398 = vsub.s32 %v395, %v397
    %v399 = vrot.slane %v392, %v398
    %v400 = vcombine.high %v399, 0.0
    %v401 = vcombine.high %v392, 0.0
    %v403 = vunpack.c.l.s4 1983009808
    %v404 = vunpack.c.0.s8 %v403
    %v405 = vlaneseq
    %v406 = vshrl.u32 %v405, 7
    %v407 = vsub.s32 %v404, %v406
    %v408 = vrot.slane %v304, %v407
    %v410 = vunpack.c.l.s4 1934713408
    %v411 = vunpack.c.0.s8 %v410
    %v412 = vlaneseq
    %v413 = vshrl.u32 %v412, 7
    %v414 = vsub.s32 %v411, %v413
    %v415 = vrot.slane %v408, %v414
    %v416 = vcombine.high %v415, 0.0
    %v417 = vcombine.high %v408, 0.0
    %422 = vrot.lane.b32.xlu0 %v368, 4
    %v423 = vpop.permute.xlu0 %422
    %424 = vrot.lane.b32.xlu0 %v384, 4
    %v425 = vpop.permute.xlu0 %424
    %426 = vrot.lane.b32.xlu0 %v400, 4
    %v427 = vpop.permute.xlu0 %426
    %428 = vrot.lane.b32.xlu0 %v416, 4
    %v429 = vpop.permute.xlu0 %428
    %438 = vrot.lane.b32.xlu0 %v369, 8
    %v439 = vpop.permute.xlu0 %438
    %440 = vrot.lane.b32.xlu0 %v385, 8
    %v441 = vpop.permute.xlu0 %440
    %442 = vrot.lane.b32.xlu0 %v401, 8
    %v443 = vpop.permute.xlu0 %442
    %444 = vrot.lane.b32.xlu0 %v417, 8
    %v445 = vpop.permute.xlu0 %444
    %v450 = vsel %vm350, %v367, %v423
    %v451 = vsel %vm350, %v383, %v425
    %v452 = vsel %vm350, %v399, %v427
    %v453 = vsel %vm350, %v415, %v429
    %v454 = vsel %vm352, %v450, %v439
    %v455 = vsel %vm352, %v451, %v441
    %v456 = vsel %vm352, %v452, %v443
    %v457 = vsel %vm352, %v453, %v445
    %v458 = vlaneseq
    %v459 = vshrl.u32 %v458, 7
    %v460 = vsub.s32 0, %v459
    %v461 = vrot.slane %v454, %v460
    %v462 = vlaneseq
    %v463 = vshrl.u32 %v462, 7
    %v464 = vsub.s32 0, %v463
    %v465 = vrot.slane %v455, %v464
    %v466 = vlaneseq
    %v467 = vshrl.u32 %v466, 7
    %v468 = vsub.s32 0, %v467
    %v469 = vrot.slane %v456, %v468
    %v470 = vlaneseq
    %v471 = vshrl.u32 %v470, 7
    %v472 = vsub.s32 0, %v471
    %v473 = vrot.slane %v457, %v472
    %v474 = vcombine.low %v221, %v222
    %v475 = vcombine.low %v224, %v225
    %v476 = vcombine.low %v227, %v228
    %v477 = vcombine.low %v230, %v231
    %vm482 = vcmp.le.f32.partialorder %v461, %v474
    %vm483 = vcmp.le.f32.partialorder %v461, %v223
    %vm484 = vcmp.le.f32.partialorder %v465, %v475
    %vm485 = vcmp.le.f32.partialorder %v465, %v226
    %vm486 = vcmp.le.f32.partialorder %v469, %v476
    %vm487 = vcmp.le.f32.partialorder %v469, %v229
    %vm488 = vcmp.le.f32.partialorder %v473, %v477
    %vm489 = vcmp.le.f32.partialorder %v473, %v232
    %v490 = vsel %vm482, 1, 0
    %v491 = vsel %vm483, 1, 0
    %v492 = vsel %vm484, 1, 0
    %v493 = vsel %vm485, 1, 0
    %v494 = vsel %vm486, 1, 0
    %v495 = vsel %vm487, 1, 0
    %v496 = vsel %vm488, 1, 0
    %v497 = vsel %vm489, 1, 0
    %v498 = vcvt.s32.f32 %v490
    %v499 = vcvt.s32.f32 %v491
    %v500 = vcvt.s32.f32 %v492
    %v501 = vcvt.s32.f32 %v493
    %v502 = vcvt.s32.f32 %v494
    %v503 = vcvt.s32.f32 %v495
    %v504 = vcvt.s32.f32 %v496
    %v505 = vcvt.s32.f32 %v497
    %vm506 = vcmask 97280
    %v507 = vsel %vm506, %v498, 0.0
    %508 = vadd.xlane.f32.xlu0 %v507
    %v509 = vpop.xlane.xlu0 %508
    %vm510 = vcmask 93184
    %v511 = vsel %vm510, %v499, 0.0
    %512 = vadd.xlane.f32.xlu0 %v511
    %v513 = vpop.xlane.xlu0 %512
    %v514 = vsel %vm506, %v500, 0.0
    %515 = vadd.xlane.f32.xlu0 %v514
    %v516 = vpop.xlane.xlu0 %515
    %v517 = vsel %vm510, %v501, 0.0
    %518 = vadd.xlane.f32.xlu0 %v517
    %v519 = vpop.xlane.xlu0 %518
    %v520 = vsel %vm506, %v502, 0.0
    %521 = vadd.xlane.f32.xlu0 %v520
    %v522 = vpop.xlane.xlu0 %521
    %v523 = vsel %vm510, %v503, 0.0
    %524 = vadd.xlane.f32.xlu0 %v523
    %v525 = vpop.xlane.xlu0 %524
    %v526 = vsel %vm506, %v504, 0.0
    %527 = vadd.xlane.f32.xlu0 %v526
    %v528 = vpop.xlane.xlu0 %527
    %v529 = vsel %vm510, %v505, 0.0
    %530 = vadd.xlane.f32.xlu0 %v529
    %v531 = vpop.xlane.xlu0 %530
    %vm532 = vcmp.ge.f32.partialorder %v509, 6.0
    %vm533 = vcmp.ge.f32.partialorder %v513, 6.0
    %vm534 = vcmp.ge.f32.partialorder %v516, 6.0
    %vm535 = vcmp.ge.f32.partialorder %v519, 6.0
    %vm536 = vcmp.ge.f32.partialorder %v522, 6.0
    %vm537 = vcmp.ge.f32.partialorder %v525, 6.0
    %vm538 = vcmp.ge.f32.partialorder %v528, 6.0
    %vm539 = vcmp.ge.f32.partialorder %v531, 6.0
    %v541 = vlaneseq
    %v542 = vshrl.u32 %v541, 7
    %v543 = vsub.s32 0, %v542
    %v544 = vrot.slane %v353, %v543
    %546 = vbcast.lane.b32.xlu0 %v544, 256
    %v547 = vpop.permute.xlu0 %546
    %s549 = sor.u32 256, 8
    %550 = vbcast.lane.b32.xlu0 %v544, %s549
    %v551 = vpop.permute.xlu0 %550
    %v552 = vlaneseq
    %v553 = vshrl.u32 %v552, 7
    %v554 = vsub.s32 1, %v553
    %v555 = vrot.slane %v353, %v554
    %557 = vbcast.lane.b32.xlu0 %v555, 256
    %v558 = vpop.permute.xlu0 %557
    %s560 = sor.u32 256, 8
    %561 = vbcast.lane.b32.xlu0 %v555, %s560
    %v562 = vpop.permute.xlu0 %561
    %v563 = vlaneseq
    %v564 = vshrl.u32 %v563, 7
    %v565 = vsub.s32 2, %v564
    %v566 = vrot.slane %v353, %v565
    %568 = vbcast.lane.b32.xlu0 %v566, 256
    %v569 = vpop.permute.xlu0 %568
    %s571 = sor.u32 256, 8
    %572 = vbcast.lane.b32.xlu0 %v566, %s571
    %v573 = vpop.permute.xlu0 %572
    %v574 = vlaneseq
    %v575 = vshrl.u32 %v574, 7
    %v576 = vsub.s32 3, %v575
    %v577 = vrot.slane %v353, %v576
    %579 = vbcast.lane.b32.xlu0 %v577, 256
    %v580 = vpop.permute.xlu0 %579
    %s582 = sor.u32 256, 8
    %583 = vbcast.lane.b32.xlu0 %v577, %s582
    %v584 = vpop.permute.xlu0 %583
    %v593 = vsel %vm532, %v547, inf
    %v594 = vsel %vm533, %v551, inf
    %v595 = vsel %vm534, %v558, inf
    %v596 = vsel %vm535, %v562, inf
    %v597 = vsel %vm536, %v569, inf
    %v598 = vsel %vm537, %v573, inf
    %v599 = vsel %vm538, %v580, inf
    %v600 = vsel %vm539, %v584, inf
    %609 = vset.pattern.permute.xlu0 0
    %610 = vperm.xlu0 %609, %v593
    %v611 = vpop.permute.xlu0 %610
    %612 = vset.pattern.permute.xlu0 0
    %613 = vperm.xlu0 %612, %v594
    %v614 = vpop.permute.xlu0 %613
    %615 = vset.pattern.permute.xlu0 0
    %616 = vperm.xlu0 %615, %v595
    %v617 = vpop.permute.xlu0 %616
    %618 = vset.pattern.permute.xlu0 0
    %619 = vperm.xlu0 %618, %v596
    %v620 = vpop.permute.xlu0 %619
    %621 = vset.pattern.permute.xlu0 0
    %622 = vperm.xlu0 %621, %v597
    %v623 = vpop.permute.xlu0 %622
    %624 = vset.pattern.permute.xlu0 0
    %625 = vperm.xlu0 %624, %v598
    %v626 = vpop.permute.xlu0 %625
    %627 = vset.pattern.permute.xlu0 0
    %628 = vperm.xlu0 %627, %v599
    %v629 = vpop.permute.xlu0 %628
    %630 = vset.pattern.permute.xlu0 0
    %631 = vperm.xlu0 %630, %v600
    %v632 = vpop.permute.xlu0 %631
    %v633 = vlaneseq
    %v634 = vshrl.u32 %v633, 7
    %v635 = vsub.s32 %v246, %v634
    %v636 = vrot.slane %v611, %v635
    %v637 = vadd.s32 %v246, 4294967288
    %v638 = vlaneseq
    %v639 = vshrl.u32 %v638, 7
    %v640 = vsub.s32 %v637, %v639
    %v641 = vrot.slane %v614, %v640
    %vm642 = vcmask 130112
    %v643 = vsel %vm642, %v641, %v636
    %v644 = vlaneseq
    %v645 = vshrl.u32 %v644, 7
    %v646 = vsub.s32 %v246, %v645
    %v647 = vrot.slane %v617, %v646
    %v648 = vlaneseq
    %v649 = vshrl.u32 %v648, 7
    %v650 = vsub.s32 %v637, %v649
    %v651 = vrot.slane %v620, %v650
    %v652 = vsel %vm642, %v651, %v647
    %v653 = vlaneseq
    %v654 = vshrl.u32 %v653, 7
    %v655 = vsub.s32 %v246, %v654
    %v656 = vrot.slane %v623, %v655
    %v657 = vlaneseq
    %v658 = vshrl.u32 %v657, 7
    %v659 = vsub.s32 %v637, %v658
    %v660 = vrot.slane %v626, %v659
    %v661 = vsel %vm642, %v660, %v656
    %v662 = vlaneseq
    %v663 = vshrl.u32 %v662, 7
    %v664 = vsub.s32 %v246, %v663
    %v665 = vrot.slane %v629, %v664
    %v666 = vlaneseq
    %v667 = vshrl.u32 %v666, 7
    %v668 = vsub.s32 %v637, %v667
    %v669 = vrot.slane %v632, %v668
    %v670 = vsel %vm642, %v669, %v665
    %v671 = vsel %vm295, %v652, %v643
    %v672 = vsel %vm297, %v661, %v671
    %vm673 = vcmask 1043459
    %v674 = vsel %vm673, %v670, %v672
    %v676 = vsel %vm510, %v674, inf
    %677 = vmin.xlane.f32.xlu0 %v676
    %v678 = vpop.xlane.xlu0 %677
    %vm679 = vcmp.ge.f32.partialorder %v509, 7.0
    %vm680 = vcmp.ge.f32.partialorder %v513, 7.0
    %vm681 = vcmp.ge.f32.partialorder %v516, 7.0
    %vm682 = vcmp.ge.f32.partialorder %v519, 7.0
    %vm683 = vcmp.ge.f32.partialorder %v522, 7.0
    %vm684 = vcmp.ge.f32.partialorder %v525, 7.0
    %vm685 = vcmp.ge.f32.partialorder %v528, 7.0
    %vm686 = vcmp.ge.f32.partialorder %v531, 7.0
    %v687 = vsel %vm679, %v547, inf
    %v688 = vsel %vm680, %v551, inf
    %v689 = vsel %vm681, %v558, inf
    %v690 = vsel %vm682, %v562, inf
    %v691 = vsel %vm683, %v569, inf
    %v692 = vsel %vm684, %v573, inf
    %v693 = vsel %vm685, %v580, inf
    %v694 = vsel %vm686, %v584, inf
    %703 = vset.pattern.permute.xlu0 0
    %704 = vperm.xlu0 %703, %v687
    %v705 = vpop.permute.xlu0 %704
    %706 = vset.pattern.permute.xlu0 0
    %707 = vperm.xlu0 %706, %v688
    %v708 = vpop.permute.xlu0 %707
    %709 = vset.pattern.permute.xlu0 0
    %710 = vperm.xlu0 %709, %v689
    %v711 = vpop.permute.xlu0 %710
    %712 = vset.pattern.permute.xlu0 0
    %713 = vperm.xlu0 %712, %v690
    %v714 = vpop.permute.xlu0 %713
    %715 = vset.pattern.permute.xlu0 0
    %716 = vperm.xlu0 %715, %v691
    %v717 = vpop.permute.xlu0 %716
    %718 = vset.pattern.permute.xlu0 0
    %719 = vperm.xlu0 %718, %v692
    %v720 = vpop.permute.xlu0 %719
    %721 = vset.pattern.permute.xlu0 0
    %722 = vperm.xlu0 %721, %v693
    %v723 = vpop.permute.xlu0 %722
    %724 = vset.pattern.permute.xlu0 0
    %725 = vperm.xlu0 %724, %v694
    %v726 = vpop.permute.xlu0 %725
    %v727 = vlaneseq
    %v728 = vshrl.u32 %v727, 7
    %v729 = vsub.s32 %v246, %v728
    %v730 = vrot.slane %v705, %v729
    %v731 = vlaneseq
    %v732 = vshrl.u32 %v731, 7
    %v733 = vsub.s32 %v637, %v732
    %v734 = vrot.slane %v708, %v733
    %v735 = vsel %vm642, %v734, %v730
    %v736 = vlaneseq
    %v737 = vshrl.u32 %v736, 7
    %v738 = vsub.s32 %v246, %v737
    %v739 = vrot.slane %v711, %v738
    %v740 = vlaneseq
    %v741 = vshrl.u32 %v740, 7
    %v742 = vsub.s32 %v637, %v741
    %v743 = vrot.slane %v714, %v742
    %v744 = vsel %vm642, %v743, %v739
    %v745 = vlaneseq
    %v746 = vshrl.u32 %v745, 7
    %v747 = vsub.s32 %v246, %v746
    %v748 = vrot.slane %v717, %v747
    %v749 = vlaneseq
    %v750 = vshrl.u32 %v749, 7
    %v751 = vsub.s32 %v637, %v750
    %v752 = vrot.slane %v720, %v751
    %v753 = vsel %vm642, %v752, %v748
    %v754 = vlaneseq
    %v755 = vshrl.u32 %v754, 7
    %v756 = vsub.s32 %v246, %v755
    %v757 = vrot.slane %v723, %v756
    %v758 = vlaneseq
    %v759 = vshrl.u32 %v758, 7
    %v760 = vsub.s32 %v637, %v759
    %v761 = vrot.slane %v726, %v760
    %v762 = vsel %vm642, %v761, %v757
    %v763 = vsel %vm295, %v744, %v735
    %v764 = vsel %vm297, %v753, %v763
    %v765 = vsel %vm673, %v762, %v764
    %v767 = vsel %vm510, %v765, inf
    %768 = vmin.xlane.f32.xlu0 %v767
    %v769 = vpop.xlane.xlu0 %768
    %v770 = vadd.f32 %v678, %v769
    %v771 = vmul.f32 %v770, 0.5
    %v772 = vsub.f32 %v353, %v771
    %v773 = vand.u32 2147483647, %v772
    %v776 = vunpack.c.l.s4 1966171168
    %v777 = vunpack.c.0.s8 %v776
    %v778 = vlaneseq
    %v779 = vshrl.u32 %v778, 7
    %v780 = vsub.s32 %v777, %v779
    %v781 = vrot.slane %v773, %v780
    %v782 = vcombine.high %v781, %v781
    %v784 = vunpack.c.l.s4 1966171168
    %v785 = vunpack.c.0.s8 %v784
    %v786 = vlaneseq
    %v787 = vshrl.u32 %v786, 7
    %v788 = vsub.s32 %v785, %v787
    %v789 = vrot.slane %v781, %v788
    %v791 = vunpack.c.l.s4 1966171168
    %v792 = vunpack.c.0.s8 %v791
    %v793 = vlaneseq
    %v794 = vshrl.u32 %v793, 7
    %v795 = vsub.s32 %v792, %v794
    %v796 = vrot.slane %v782, %v795
    %v797 = vcombine.high %v789, %v789
    %v798 = vcombine.high %v796, %v796
    %v799 = vlaneseq
    %v800 = vshrl.u32 %v799, 7
    %v801 = vsub.s32 0, %v800
    %v802 = vrot.slane %v773, %v801
    %804 = vbcast.lane.b32.xlu0 %v802, 256
    %v805 = vpop.permute.xlu0 %804
    %s807 = sor.u32 256, 8
    %808 = vbcast.lane.b32.xlu0 %v802, %s807
    %v809 = vpop.permute.xlu0 %808
    %v810 = vlaneseq
    %v811 = vshrl.u32 %v810, 7
    %v812 = vsub.s32 1, %v811
    %v813 = vrot.slane %v773, %v812
    %815 = vbcast.lane.b32.xlu0 %v813, 256
    %v816 = vpop.permute.xlu0 %815
    %s818 = sor.u32 256, 8
    %819 = vbcast.lane.b32.xlu0 %v813, %s818
    %v820 = vpop.permute.xlu0 %819
    %v821 = vlaneseq
    %v822 = vshrl.u32 %v821, 7
    %v823 = vsub.s32 2, %v822
    %v824 = vrot.slane %v773, %v823
    %826 = vbcast.lane.b32.xlu0 %v824, 256
    %v827 = vpop.permute.xlu0 %826
    %s829 = sor.u32 256, 8
    %830 = vbcast.lane.b32.xlu0 %v824, %s829
    %v831 = vpop.permute.xlu0 %830
    %v832 = vlaneseq
    %v833 = vshrl.u32 %v832, 7
    %v834 = vsub.s32 3, %v833
    %v835 = vrot.slane %v773, %v834
    %837 = vbcast.lane.b32.xlu0 %v835, 256
    %v838 = vpop.permute.xlu0 %837
    %s840 = sor.u32 256, 8
    %841 = vbcast.lane.b32.xlu0 %v835, %s840
    %v842 = vpop.permute.xlu0 %841
    %v843 = vlaneseq
    %v844 = vshrl.u32 %v843, 7
    %v845 = vsub.s32 0, %v844
    %v846 = vrot.slane %v789, %v845
    %v847 = vlaneseq
    %v848 = vshrl.u32 %v847, 7
    %v849 = vsub.s32 0, %v848
    %v850 = vrot.slane %v796, %v849
    %v851 = vlaneseq
    %v852 = vshrl.u32 %v851, 7
    %v853 = vsub.s32 0, %v852
    %v854 = vrot.slane %v797, %v853
    %v855 = vlaneseq
    %v856 = vshrl.u32 %v855, 7
    %v857 = vsub.s32 0, %v856
    %v858 = vrot.slane %v798, %v857
    %vm863 = vcmp.le.f32.partialorder %v846, %v805
    %vm864 = vcmp.le.f32.partialorder %v846, %v809
    %vm865 = vcmp.le.f32.partialorder %v850, %v816
    %vm866 = vcmp.le.f32.partialorder %v850, %v820
    %vm867 = vcmp.le.f32.partialorder %v854, %v827
    %vm868 = vcmp.le.f32.partialorder %v854, %v831
    %vm869 = vcmp.le.f32.partialorder %v858, %v838
    %vm870 = vcmp.le.f32.partialorder %v858, %v842
    %v871 = vsel %vm863, 1, 0
    %v872 = vsel %vm864, 1, 0
    %v873 = vsel %vm865, 1, 0
    %v874 = vsel %vm866, 1, 0
    %v875 = vsel %vm867, 1, 0
    %v876 = vsel %vm868, 1, 0
    %v877 = vsel %vm869, 1, 0
    %v878 = vsel %vm870, 1, 0
    %v879 = vcvt.s32.f32 %v871
    %v880 = vcvt.s32.f32 %v872
    %v881 = vcvt.s32.f32 %v873
    %v882 = vcvt.s32.f32 %v874
    %v883 = vcvt.s32.f32 %v875
    %v884 = vcvt.s32.f32 %v876
    %v885 = vcvt.s32.f32 %v877
    %v886 = vcvt.s32.f32 %v878
    %v887 = vsel %vm506, %v879, 0.0
    %888 = vadd.xlane.f32.xlu0 %v887
    %v889 = vpop.xlane.xlu0 %888
    %v890 = vsel %vm510, %v880, 0.0
    %891 = vadd.xlane.f32.xlu0 %v890
    %v892 = vpop.xlane.xlu0 %891
    %v893 = vsel %vm506, %v881, 0.0
    %894 = vadd.xlane.f32.xlu0 %v893
    %v895 = vpop.xlane.xlu0 %894
    %v896 = vsel %vm510, %v882, 0.0
    %897 = vadd.xlane.f32.xlu0 %v896
    %v898 = vpop.xlane.xlu0 %897
    %v899 = vsel %vm506, %v883, 0.0
    %900 = vadd.xlane.f32.xlu0 %v899
    %v901 = vpop.xlane.xlu0 %900
    %v902 = vsel %vm510, %v884, 0.0
    %903 = vadd.xlane.f32.xlu0 %v902
    %v904 = vpop.xlane.xlu0 %903
    %v905 = vsel %vm506, %v885, 0.0
    %906 = vadd.xlane.f32.xlu0 %v905
    %v907 = vpop.xlane.xlu0 %906
    %v908 = vsel %vm510, %v886, 0.0
    %909 = vadd.xlane.f32.xlu0 %v908
    %v910 = vpop.xlane.xlu0 %909
    %vm911 = vcmp.ge.f32.partialorder %v889, 6.0
    %vm912 = vcmp.ge.f32.partialorder %v892, 6.0
    %vm913 = vcmp.ge.f32.partialorder %v895, 6.0
    %vm914 = vcmp.ge.f32.partialorder %v898, 6.0
    %vm915 = vcmp.ge.f32.partialorder %v901, 6.0
    %vm916 = vcmp.ge.f32.partialorder %v904, 6.0
    %vm917 = vcmp.ge.f32.partialorder %v907, 6.0
    %vm918 = vcmp.ge.f32.partialorder %v910, 6.0
    %v919 = vlaneseq
    %v920 = vshrl.u32 %v919, 7
    %v921 = vsub.s32 0, %v920
    %v922 = vrot.slane %v773, %v921
    %924 = vbcast.lane.b32.xlu0 %v922, 256
    %v925 = vpop.permute.xlu0 %924
    %s927 = sor.u32 256, 8
    %928 = vbcast.lane.b32.xlu0 %v922, %s927
    %v929 = vpop.permute.xlu0 %928
    %v930 = vlaneseq
    %v931 = vshrl.u32 %v930, 7
    %v932 = vsub.s32 1, %v931
    %v933 = vrot.slane %v773, %v932
    %935 = vbcast.lane.b32.xlu0 %v933, 256
    %v936 = vpop.permute.xlu0 %935
    %s938 = sor.u32 256, 8
    %939 = vbcast.lane.b32.xlu0 %v933, %s938
    %v940 = vpop.permute.xlu0 %939
    %v941 = vlaneseq
    %v942 = vshrl.u32 %v941, 7
    %v943 = vsub.s32 2, %v942
    %v944 = vrot.slane %v773, %v943
    %946 = vbcast.lane.b32.xlu0 %v944, 256
    %v947 = vpop.permute.xlu0 %946
    %s949 = sor.u32 256, 8
    %950 = vbcast.lane.b32.xlu0 %v944, %s949
    %v951 = vpop.permute.xlu0 %950
    %v952 = vlaneseq
    %v953 = vshrl.u32 %v952, 7
    %v954 = vsub.s32 3, %v953
    %v955 = vrot.slane %v773, %v954
    %957 = vbcast.lane.b32.xlu0 %v955, 256
    %v958 = vpop.permute.xlu0 %957
    %s960 = sor.u32 256, 8
    %961 = vbcast.lane.b32.xlu0 %v955, %s960
    %v962 = vpop.permute.xlu0 %961
    %v971 = vsel %vm911, %v925, inf
    %v972 = vsel %vm912, %v929, inf
    %v973 = vsel %vm913, %v936, inf
    %v974 = vsel %vm914, %v940, inf
    %v975 = vsel %vm915, %v947, inf
    %v976 = vsel %vm916, %v951, inf
    %v977 = vsel %vm917, %v958, inf
    %v978 = vsel %vm918, %v962, inf
    %987 = vset.pattern.permute.xlu0 0
    %988 = vperm.xlu0 %987, %v971
    %v989 = vpop.permute.xlu0 %988
    %990 = vset.pattern.permute.xlu0 0
    %991 = vperm.xlu0 %990, %v972
    %v992 = vpop.permute.xlu0 %991
    %993 = vset.pattern.permute.xlu0 0
    %994 = vperm.xlu0 %993, %v973
    %v995 = vpop.permute.xlu0 %994
    %996 = vset.pattern.permute.xlu0 0
    %997 = vperm.xlu0 %996, %v974
    %v998 = vpop.permute.xlu0 %997
    %999 = vset.pattern.permute.xlu0 0
    %1000 = vperm.xlu0 %999, %v975
    %v1001 = vpop.permute.xlu0 %1000
    %1002 = vset.pattern.permute.xlu0 0
    %1003 = vperm.xlu0 %1002, %v976
    %v1004 = vpop.permute.xlu0 %1003
    %1005 = vset.pattern.permute.xlu0 0
    %1006 = vperm.xlu0 %1005, %v977
    %v1007 = vpop.permute.xlu0 %1006
    %1008 = vset.pattern.permute.xlu0 0
    %1009 = vperm.xlu0 %1008, %v978
    %v1010 = vpop.permute.xlu0 %1009
    %v1011 = vlaneseq
    %v1012 = vshrl.u32 %v1011, 7
    %v1013 = vsub.s32 %v246, %v1012
    %v1014 = vrot.slane %v989, %v1013
    %v1015 = vlaneseq
    %v1016 = vshrl.u32 %v1015, 7
    %v1017 = vsub.s32 %v637, %v1016
    %v1018 = vrot.slane %v992, %v1017
    %v1019 = vsel %vm642, %v1018, %v1014
    %v1020 = vlaneseq
    %v1021 = vshrl.u32 %v1020, 7
    %v1022 = vsub.s32 %v246, %v1021
    %v1023 = vrot.slane %v995, %v1022
    %v1024 = vlaneseq
    %v1025 = vshrl.u32 %v1024, 7
    %v1026 = vsub.s32 %v637, %v1025
    %v1027 = vrot.slane %v998, %v1026
    %v1028 = vsel %vm642, %v1027, %v1023
    %v1029 = vlaneseq
    %v1030 = vshrl.u32 %v1029, 7
    %v1031 = vsub.s32 %v246, %v1030
    %v1032 = vrot.slane %v1001, %v1031
    %v1033 = vlaneseq
    %v1034 = vshrl.u32 %v1033, 7
    %v1035 = vsub.s32 %v637, %v1034
    %v1036 = vrot.slane %v1004, %v1035
    %v1037 = vsel %vm642, %v1036, %v1032
    %v1038 = vlaneseq
    %v1039 = vshrl.u32 %v1038, 7
    %v1040 = vsub.s32 %v246, %v1039
    %v1041 = vrot.slane %v1007, %v1040
    %v1042 = vlaneseq
    %v1043 = vshrl.u32 %v1042, 7
    %v1044 = vsub.s32 %v637, %v1043
    %v1045 = vrot.slane %v1010, %v1044
    %v1046 = vsel %vm642, %v1045, %v1041
    %v1047 = vsel %vm295, %v1028, %v1019
    %v1048 = vsel %vm297, %v1037, %v1047
    %v1049 = vsel %vm673, %v1046, %v1048
    %v1051 = vsel %vm510, %v1049, inf
    %1052 = vmin.xlane.f32.xlu0 %v1051
    %v1053 = vpop.xlane.xlu0 %1052
    %vm1054 = vcmp.ge.f32.partialorder %v889, 7.0
    %vm1055 = vcmp.ge.f32.partialorder %v892, 7.0
    %vm1056 = vcmp.ge.f32.partialorder %v895, 7.0
    %vm1057 = vcmp.ge.f32.partialorder %v898, 7.0
    %vm1058 = vcmp.ge.f32.partialorder %v901, 7.0
    %vm1059 = vcmp.ge.f32.partialorder %v904, 7.0
    %vm1060 = vcmp.ge.f32.partialorder %v907, 7.0
    %vm1061 = vcmp.ge.f32.partialorder %v910, 7.0
    %v1062 = vsel %vm1054, %v925, inf
    %v1063 = vsel %vm1055, %v929, inf
    %v1064 = vsel %vm1056, %v936, inf
    %v1065 = vsel %vm1057, %v940, inf
    %v1066 = vsel %vm1058, %v947, inf
    %v1067 = vsel %vm1059, %v951, inf
    %v1068 = vsel %vm1060, %v958, inf
    %v1069 = vsel %vm1061, %v962, inf
    %1078 = vset.pattern.permute.xlu0 0
    %1079 = vperm.xlu0 %1078, %v1062
    %v1080 = vpop.permute.xlu0 %1079
    %1081 = vset.pattern.permute.xlu0 0
    %1082 = vperm.xlu0 %1081, %v1063
    %v1083 = vpop.permute.xlu0 %1082
    %1084 = vset.pattern.permute.xlu0 0
    %1085 = vperm.xlu0 %1084, %v1064
    %v1086 = vpop.permute.xlu0 %1085
    %1087 = vset.pattern.permute.xlu0 0
    %1088 = vperm.xlu0 %1087, %v1065
    %v1089 = vpop.permute.xlu0 %1088
    %1090 = vset.pattern.permute.xlu0 0
    %1091 = vperm.xlu0 %1090, %v1066
    %v1092 = vpop.permute.xlu0 %1091
    %1093 = vset.pattern.permute.xlu0 0
    %1094 = vperm.xlu0 %1093, %v1067
    %v1095 = vpop.permute.xlu0 %1094
    %1096 = vset.pattern.permute.xlu0 0
    %1097 = vperm.xlu0 %1096, %v1068
    %v1098 = vpop.permute.xlu0 %1097
    %1099 = vset.pattern.permute.xlu0 0
    %1100 = vperm.xlu0 %1099, %v1069
    %v1101 = vpop.permute.xlu0 %1100
    %v1102 = vlaneseq
    %v1103 = vshrl.u32 %v1102, 7
    %v1104 = vsub.s32 %v246, %v1103
    %v1105 = vrot.slane %v1080, %v1104
    %v1106 = vlaneseq
    %v1107 = vshrl.u32 %v1106, 7
    %v1108 = vsub.s32 %v637, %v1107
    %v1109 = vrot.slane %v1083, %v1108
    %v1110 = vsel %vm642, %v1109, %v1105
    %v1111 = vlaneseq
    %v1112 = vshrl.u32 %v1111, 7
    %v1113 = vsub.s32 %v246, %v1112
    %v1114 = vrot.slane %v1086, %v1113
    %v1115 = vlaneseq
    %v1116 = vshrl.u32 %v1115, 7
    %v1117 = vsub.s32 %v637, %v1116
    %v1118 = vrot.slane %v1089, %v1117
    %v1119 = vsel %vm642, %v1118, %v1114
    %v1120 = vlaneseq
    %v1121 = vshrl.u32 %v1120, 7
    %v1122 = vsub.s32 %v246, %v1121
    %v1123 = vrot.slane %v1092, %v1122
    %v1124 = vlaneseq
    %v1125 = vshrl.u32 %v1124, 7
    %v1126 = vsub.s32 %v637, %v1125
    %v1127 = vrot.slane %v1095, %v1126
    %v1128 = vsel %vm642, %v1127, %v1123
    %v1129 = vlaneseq
    %v1130 = vshrl.u32 %v1129, 7
    %v1131 = vsub.s32 %v246, %v1130
    %v1132 = vrot.slane %v1098, %v1131
    %v1133 = vlaneseq
    %v1134 = vshrl.u32 %v1133, 7
    %v1135 = vsub.s32 %v637, %v1134
    %v1136 = vrot.slane %v1101, %v1135
    %v1137 = vsel %vm642, %v1136, %v1132
    %v1138 = vsel %vm295, %v1119, %v1110
    %v1139 = vsel %vm297, %v1128, %v1138
    %v1140 = vsel %vm673, %v1137, %v1139
    %v1142 = vsel %vm510, %v1140, inf
    %1143 = vmin.xlane.f32.xlu0 %v1142
    %v1144 = vpop.xlane.xlu0 %1143
    %v1145 = vadd.f32 %v1053, %v1144
    %v1146 = vmul.f32 %v1145, 0.5
    %v1147 = vmul.f32 %v1146, 1.4826
    %v1148 = vmax.f32 %v1147, 1e-12
    %v1149 = vrcp.pop %v1148
    %v1150 = vmul.f32 %v773, %v1149
    %v1151 = vlaneseq
    %v1152 = vshrl.u32 %v1151, 7
    %v1153 = vadd.s32 %v1152, 8
    %vm1154 = vcmp.eq.s32.totalorder %v1152, %v246
    %vm1155 = vcmp.eq.s32.totalorder %v1153, %v246
    %v1156 = vsel %vm1154, 1, 0
    %v1157 = vsel %vm1155, 1, 0
    %v1158 = vcvt.s32.f32 %v1156
    %v1159 = vcvt.s32.f32 %v1157
    %v1160 = vsel %vm506, %v353, 0
    %v1163 = vsel %vm183, %v1159, 0
    %1165 = vmatprep.subr.mxu0 0.0
    %1166 = vmatpush1.msra.mxu0 %v1158
    %1167 = vmatprep.subr.mxu0 0.0
    %1168 = vmatpush1.msra.mxu0 %v1163
    %1169 = vmatprep.subr.mxu0 0.0
    %1170 = vmatpush1.msra.mxu0 0.0
    %1171 = vmatprep.subr.mxu0 0.0
    %1172 = vmatpush1.msra.mxu0 0.0
    %1173 = vmatprep.subr.mxu0 0.0
    %1174 = vmatpush1.msra.mxu0 0.0
    %1175 = vmatprep.subr.mxu0 0.0
    %1176 = vmatpush1.msra.mxu0 0.0
    %1177 = vmatprep.subr.mxu0 0.0
    %1178 = vmatpush1.msra.mxu0 0.0
    %1179 = vmatprep.subr.mxu0 0.0
    %1180 = vmatpush1.msra.mxu0 0.0
    %1181 = vmatprep.subr.mxu0 0.0
    %1182 = vmatpush1.msra.mxu0 0.0
    %1183 = vmatprep.subr.mxu0 0.0
    %1184 = vmatpush1.msra.mxu0 0.0
    %1185 = vmatprep.subr.mxu0 0.0
    %1186 = vmatpush1.msra.mxu0 0.0
    %1187 = vmatprep.subr.mxu0 0.0
    %1188 = vmatpush1.msra.mxu0 0.0
    %1189 = vmatprep.subr.mxu0 0.0
    %1190 = vmatpush1.msra.mxu0 0.0
    %1191 = vmatprep.subr.mxu0 0.0
    %1192 = vmatpush1.msra.mxu0 0.0
    %1193 = vmatprep.subr.mxu0 0.0
    %1194 = vmatpush1.msra.mxu0 0.0
    %1195 = vmatprep.subr.mxu0 0.0
    %1196 = vmatpush1.msra.mxu0 0.0
    %1197 = vmatprep.subr.mxu0 0.0
    %1198 = vmatpush1.msra.mxu0 0.0
    %1199 = vmatprep.subr.mxu0 0.0
    %1200 = vmatpush1.msra.mxu0 0.0
    %1201 = vmatprep.subr.mxu0 0.0
    %1202 = vmatpush1.msra.mxu0 0.0
    %1203 = vmatprep.subr.mxu0 0.0
    %1204 = vmatpush1.msra.mxu0 0.0
    %1205 = vmatprep.subr.mxu0 0.0
    %1206 = vmatpush1.msra.mxu0 0.0
    %1207 = vmatprep.subr.mxu0 0.0
    %1208 = vmatpush1.msra.mxu0 0.0
    %1209 = vmatprep.subr.mxu0 0.0
    %1210 = vmatpush1.msra.mxu0 0.0
    %1211 = vmatprep.subr.mxu0 0.0
    %1212 = vmatpush1.msra.mxu0 0.0
    %1213 = vmatprep.subr.mxu0 0.0
    %1214 = vmatpush1.msra.mxu0 0.0
    %1215 = vmatprep.subr.mxu0 0.0
    %1216 = vmatpush1.msra.mxu0 0.0
    %1217 = vmatprep.subr.mxu0 0.0
    %1218 = vmatpush1.msra.mxu0 0.0
    %1219 = vmatprep.subr.mxu0 0.0
    %1220 = vmatpush1.msra.mxu0 0.0
    %1221 = vmatprep.subr.mxu0 0.0
    %1222 = vmatpush1.msra.mxu0 0.0
    %1223 = vmatprep.subr.mxu0 0.0
    %1224 = vmatpush1.msra.mxu0 0.0
    %1225 = vmatprep.subr.mxu0 0.0
    %1226 = vmatpush1.msra.mxu0 0.0
    %1227 = vmatprep.subr.mxu0 0.0
    %1228 = vmatpush1.msra.mxu0 0.0
    %1229 = vmatprep.mubr.f32.mxu0 0.0
    %1230 = vmatmul.mubr.f32.gmra.mrb[0].mxu0 %v1160
    %v1231 = vpop.f32.mrb[0].mxu0
    %v1232 = vadd.f32 0.0, %v1231
    %v1233 = vpop.f32.mrb[0].mxu0
    %1234 = vdwg.mxu0
    %1235 = vst [vmem:[#allocation2] sm:$0xf] %v1232
    %v1237 = vsel %vm506, %v1150, 0
    %1239 = vmatprep.subr.mxu0 0.0
    %1240 = vmatpush1.msra.mxu0 %v1158
    %1241 = vmatprep.subr.mxu0 0.0
    %1242 = vmatpush1.msra.mxu0 %v1163
    %1243 = vmatprep.subr.mxu0 0.0
    %1244 = vmatpush1.msra.mxu0 0.0
    %1245 = vmatprep.subr.mxu0 0.0
    %1246 = vmatpush1.msra.mxu0 0.0
    %1247 = vmatprep.subr.mxu0 0.0
    %1248 = vmatpush1.msra.mxu0 0.0
    %1249 = vmatprep.subr.mxu0 0.0
    %1250 = vmatpush1.msra.mxu0 0.0
    %1251 = vmatprep.subr.mxu0 0.0
    %1252 = vmatpush1.msra.mxu0 0.0
    %1253 = vmatprep.subr.mxu0 0.0
    %1254 = vmatpush1.msra.mxu0 0.0
    %1255 = vmatprep.subr.mxu0 0.0
    %1256 = vmatpush1.msra.mxu0 0.0
    %1257 = vmatprep.subr.mxu0 0.0
    %1258 = vmatpush1.msra.mxu0 0.0
    %1259 = vmatprep.subr.mxu0 0.0
    %1260 = vmatpush1.msra.mxu0 0.0
    %1261 = vmatprep.subr.mxu0 0.0
    %1262 = vmatpush1.msra.mxu0 0.0
    %1263 = vmatprep.subr.mxu0 0.0
    %1264 = vmatpush1.msra.mxu0 0.0
    %1265 = vmatprep.subr.mxu0 0.0
    %1266 = vmatpush1.msra.mxu0 0.0
    %1267 = vmatprep.subr.mxu0 0.0
    %1268 = vmatpush1.msra.mxu0 0.0
    %1269 = vmatprep.subr.mxu0 0.0
    %1270 = vmatpush1.msra.mxu0 0.0
    %1271 = vmatprep.subr.mxu0 0.0
    %1272 = vmatpush1.msra.mxu0 0.0
    %1273 = vmatprep.subr.mxu0 0.0
    %1274 = vmatpush1.msra.mxu0 0.0
    %1275 = vmatprep.subr.mxu0 0.0
    %1276 = vmatpush1.msra.mxu0 0.0
    %1277 = vmatprep.subr.mxu0 0.0
    %1278 = vmatpush1.msra.mxu0 0.0
    %1279 = vmatprep.subr.mxu0 0.0
    %1280 = vmatpush1.msra.mxu0 0.0
    %1281 = vmatprep.subr.mxu0 0.0
    %1282 = vmatpush1.msra.mxu0 0.0
    %1283 = vmatprep.subr.mxu0 0.0
    %1284 = vmatpush1.msra.mxu0 0.0
    %1285 = vmatprep.subr.mxu0 0.0
    %1286 = vmatpush1.msra.mxu0 0.0
    %1287 = vmatprep.subr.mxu0 0.0
    %1288 = vmatpush1.msra.mxu0 0.0
    %1289 = vmatprep.subr.mxu0 0.0
    %1290 = vmatpush1.msra.mxu0 0.0
    %1291 = vmatprep.subr.mxu0 0.0
    %1292 = vmatpush1.msra.mxu0 0.0
    %1293 = vmatprep.subr.mxu0 0.0
    %1294 = vmatpush1.msra.mxu0 0.0
    %1295 = vmatprep.subr.mxu0 0.0
    %1296 = vmatpush1.msra.mxu0 0.0
    %1297 = vmatprep.subr.mxu0 0.0
    %1298 = vmatpush1.msra.mxu0 0.0
    %1299 = vmatprep.subr.mxu0 0.0
    %1300 = vmatpush1.msra.mxu0 0.0
    %1301 = vmatprep.subr.mxu0 0.0
    %1302 = vmatpush1.msra.mxu0 0.0
    %1303 = vmatprep.mubr.f32.mxu0 0.0
    %1304 = vmatmul.mubr.f32.gmra.mrb[0].mxu0 %v1237
    %v1305 = vpop.f32.mrb[0].mxu0
    %v1306 = vadd.f32 0.0, %v1305
    %v1307 = vpop.f32.mrb[0].mxu0
    %1308 = vdwg.mxu0
    %1309 = vst [vmem:[#allocation2 + $0x4] sm:$0xf] %v1306
    // Predicated region
    $region10: #{tpu_custom_call.1} parent=1 // pred_check
      _
    $region11: #{tpu_custom_call.1} parent=1 // pred_check_branch
      %1311 = sbr.rel (0) target = $region13
    $region12: #{tpu_custom_call.1} parent=1 // pred_region
      %s1313 = ssub.s32 128, 128
      %1314 = vsyncadd [#allocation3], %s1313
      %s1316 = sshll.u32 [#allocation2], 4
      %s1317 = int_to_ptr.vmem [resolvable:$true] %s1316
      %1319 = dma.vmem_to_hbm [thread:$0]  %s1317, 128, %s2, [#allocation3]
    $region13: #{tpu_custom_call.1} parent=1 // pred_fallthru
      _
    // Predicated region
    $region14: #{tpu_custom_call.1} parent=1 // pred_check
      _
    $region15: #{tpu_custom_call.1} parent=1 // pred_check_branch
      %1321 = sbr.rel (0) target = $region17
    $region16: #{tpu_custom_call.1} parent=1 // pred_region
      %1322 = dma.done [#allocation3], 128
    $region17: #{tpu_custom_call.1} parent=1 // pred_fallthru
      _
    %1323 = vsyncpa [#allocation3], 1

</llo_original>
